<compile_context>
chip_gen: v6e
topology: v6e:2x2x1
jax: 0.10.0
libtpu: 0.0.40
codegen_flags: <defaults>
</compile_context>

<pallas_src>
import math
from functools import partial

import jax
import jax.numpy as jnp
from jax.experimental import pallas as pl
from jax.experimental.pallas import tpu as pltpu


def _round_up(x, m):
    return (x + m - 1) // m * m


def _device_tile_config():
    """(tm_max, min_steps, even_steps) per TPU generation.

    v7x: 3.2 TB/s HBM -> per-step overhead dominates small tiles, and 2 TCs
         want >= 8 (even) grid steps.  v6e: 1 TC, 32 MiB scoped VMEM.
         v5e & fallback: 16 MiB scoped VMEM default -> keep tiles modest."""
    try:
        kind = jax.devices()[0].device_kind.lower()
    except Exception:
        kind = ""
    if "v7" in kind:
        return 4096, 8, True
    if "v6" in kind:
        return 2048, 1, False
    return 1024, 1, False


def _pick_tm(m, tm_max, min_steps, even_steps):
    """Static row-tile size.  Big tiles, >= min_steps grid steps when possible,
    even step count when asked (v7x megacore).  Ragged last block is fine —
    Pallas masks the partial stores."""
    m8 = _round_up(max(m, 8), 8)
    tm = min(_round_up(tm_max, 8), m8)
    while tm > 256 and pl.cdiv(m, tm) < min_steps:
        tm = _round_up(tm // 2, 8)
    steps = pl.cdiv(m, tm)
    if even_steps and steps > 1 and steps % 2 == 1:
        tm_alt = _round_up(pl.cdiv(m, steps + 1), 8)
        if tm_alt >= 8:
            tm = tm_alt
    return tm


def _mlp_kernel(x_ref, w1_ref, b1_ref, w2_ref, b2_ref, o_ref):
    # x_ref:  (TM, C_in) f32   tile of flattened points
    # w1_ref: (C_in, H)  f32   linear1 weight, transposed
    # b1_ref: (1, H)     f32
    # w2_ref: (H, H)     bf16  linear2 weight, transposed
    # b2_ref: (1, H)     f32
    # o_ref:  (TM, H)    out_dtype
    x = x_ref[...]
    w1 = w1_ref[...]
    # Layer 1: contraction depth C_in is tiny -> unrolled rank-1 broadcast
    # FMAs on the VPU (bias + ReLU in f32); keeps the MXU free for layer 2.
    h = b1_ref[...]                                    # (1, H), broadcasts
    for k in range(x.shape[1]):                        # C_in is small & static
        h = h + x[:, k:k + 1] * w1[k:k + 1, :]
    h = jnp.maximum(h, 0.0)                            # ReLU in f32
    # Layer 2: 128x128 matmul on the MXU in bf16 with f32 accumulation.
    o = jnp.dot(h.astype(jnp.bfloat16), w2_ref[...],
                preferred_element_type=jnp.float32)
    o_ref[...] = (o + b2_ref[...]).astype(o_ref.dtype)


def prepare_params(w1, b1, w2, b2):
    """One-time parameter prep (hoisted out of the per-call path):
    transpose to (in, out) layout and cast W2 to bf16 for the MXU."""
    return (jnp.asarray(w1, jnp.float32).T,                       # (C_in, H)
            jnp.asarray(b1, jnp.float32).reshape(1, -1),          # (1, H)
            jnp.asarray(w2, jnp.float32).T.astype(jnp.bfloat16),  # (H, H) bf16
            jnp.asarray(b2, jnp.float32).reshape(1, -1))          # (1, H)


@partial(jax.jit, static_argnames=("tm_max", "out_dtype"))
def pointcloud_mlp(x, w1_t, b1_r, w2_t, b2_r, *, tm_max=None,
                   out_dtype=jnp.float32):
    """x: (B, N, C_in) f32; params from prepare_params().
    Returns (B, N, H) = linear2(relu(linear1(x))) in out_dtype (f32 default)."""
    B, N, C_in = x.shape
    H = w1_t.shape[1]
    M = B * N

    cfg_tm_max, min_steps, even_steps = _device_tile_config()
    if tm_max is not None:
        cfg_tm_max = tm_max
    tm = _pick_tm(M, cfg_tm_max, min_steps, even_steps)
    grid = (pl.cdiv(M, tm),)          # ragged last block handled by Pallas

    x2 = x.reshape(M, C_in).astype(jnp.float32)
    out_itemsize = jnp.dtype(out_dtype).itemsize

    cost = pl.CostEstimate(
        flops=2 * M * (C_in * H + H * H),
        transcendentals=0,
        bytes_accessed=M * C_in * 4 + M * H * out_itemsize      # x in + out
                       + (C_in * H + 2 * H) * 4 + H * H * 2)    # params

    out = pl.pallas_call(
        _mlp_kernel,
        out_shape=jax.ShapeDtypeStruct((M, H), out_dtype),
        grid_spec=pltpu.PrefetchScalarGridSpec(
            num_scalar_prefetch=0,
            grid=grid,
            in_specs=[
                pl.BlockSpec((tm, C_in), lambda i: (i, 0)),   # x tile
                pl.BlockSpec((C_in, H), lambda i: (0, 0)),    # W1^T (resident)
                pl.BlockSpec((1, H), lambda i: (0, 0)),       # b1   (resident)
                pl.BlockSpec((H, H), lambda i: (0, 0)),       # W2^T (resident)
                pl.BlockSpec((1, H), lambda i: (0, 0)),       # b2   (resident)
            ],
            out_specs=pl.BlockSpec((tm, H), lambda i: (i, 0)),
        ),
        compiler_params=pltpu.CompilerParams(
            dimension_semantics=("parallel",)),
        cost_estimate=cost,
    )(x2, w1_t, b1_r, w2_t, b2_r)

    return out.reshape(B, N, H)


def init_params(key, input_size=4, hidden_size=128):
    # Deterministic init mimicking nn.Linear's uniform(-1/sqrt(fan_in), ...).
    k1, k2, k3, k4 = jax.random.split(key, 4)
    bound1 = 1.0 / math.sqrt(input_size)
    bound2 = 1.0 / math.sqrt(hidden_size)
    w1 = jax.random.uniform(k1, (hidden_size, input_size), jnp.float32,
                            -bound1, bound1)
    b1 = jax.random.uniform(k2, (hidden_size,), jnp.float32, -bound1, bound1)
    w2 = jax.random.uniform(k3, (hidden_size, hidden_size), jnp.float32,
                            -bound2, bound2)
    b2 = jax.random.uniform(k4, (hidden_size,), jnp.float32, -bound2, bound2)
    return w1, b1, w2, b2


if __name__ == "__main__":
    key = jax.random.PRNGKey(0)
    kx, kp, kx2 = jax.random.split(key, 3)

    B, N, C_in, H = 2, 8, 4, 128          # small test: 2 clouds x 8 points
    x = jax.random.normal(kx, (B, N, C_in), dtype=jnp.float32)
    w1, b1, w2, b2 = init_params(kp, input_size=C_in, hidden_size=H)

    params = prepare_params(w1, b1, w2, b2)   # one-time layout/dtype prep
    out = jax.block_until_ready(pointcloud_mlp(x, *params))

    # Reference in plain f32 JAX (same semantics as the PyTorch module).
    # Tolerance is loosened because layer 2 runs in bf16 on the MXU.
    h_ref = jnp.maximum(x @ w1.T + b1, 0.0)
    ref = h_ref @ w2.T + b2
    assert out.shape == (B, N, H)
    assert jnp.allclose(out, ref, atol=5e-2, rtol=5e-2), (
        float(jnp.max(jnp.abs(out - ref))))

    # Ragged-M check: M = 3*7 = 21 is not a tile multiple; the cdiv grid +
    # masked partial last block replaces the old pad/slice path.
    xr = jax.random.normal(kx2, (3, 7, C_in), dtype=jnp.float32)
    out_r = jax.block_until_ready(pointcloud_mlp(xr, *params))
    ref_r = jnp.maximum(xr @ w1.T + b1, 0.0) @ w2.T + b2
    assert out_r.shape == (3, 7, H)
    assert jnp.allclose(out_r, ref_r, atol=5e-2, rtol=5e-2), (
        float(jnp.max(jnp.abs(out_r - ref_r))))

    print("KERNEL_OK")
</pallas_src>

<mosaic_0001>
module attributes {stable_mosaic.version = 11 : i64} {
  func.func @_mlp_kernel(%arg0: i32, %arg1: memref<16x4xf32, #tpu.memory_space<vmem>>, %arg2: memref<4x128xf32, #tpu.memory_space<vmem>>, %arg3: memref<1x128xf32, #tpu.memory_space<vmem>>, %arg4: memref<128x128xbf16, #tpu.memory_space<vmem>>, %arg5: memref<1x128xf32, #tpu.memory_space<vmem>>, %arg6: memref<16x128xf32, #tpu.memory_space<vmem>>) attributes {dimension_semantics = [#tpu.dimension_semantics<parallel>], iteration_bounds = array<i64: 1>, scalar_prefetch = 0 : i64, scratch_operands = 0 : i64, tpu.core_type = #tpu.core_type<tc>, window_params = [{transform_indices = @transform_0, window_bounds = array<i64: 16, 4>}, {pipeline_mode = #tpu.pipeline_mode<synchronous>, transform_indices = @transform_1, window_bounds = array<i64: 4, 128>}, {pipeline_mode = #tpu.pipeline_mode<synchronous>, transform_indices = @transform_2, window_bounds = array<i64: 1, 128>}, {pipeline_mode = #tpu.pipeline_mode<synchronous>, transform_indices = @transform_3, window_bounds = array<i64: 128, 128>}, {pipeline_mode = #tpu.pipeline_mode<synchronous>, transform_indices = @transform_4, window_bounds = array<i64: 1, 128>}, {transform_indices = @transform_5, window_bounds = array<i64: 16, 128>}]} {
    %c0 = arith.constant 0 : index
    %c0_0 = arith.constant 0 : index
    %0 = vector.load %arg1[%c0, %c0_0] : memref<16x4xf32, #tpu.memory_space<vmem>>, vector<16x4xf32>
    %c0_1 = arith.constant 0 : index
    %c0_2 = arith.constant 0 : index
    %1 = vector.load %arg2[%c0_1, %c0_2] : memref<4x128xf32, #tpu.memory_space<vmem>>, vector<4x128xf32>
    %c0_3 = arith.constant 0 : index
    %c0_4 = arith.constant 0 : index
    %2 = vector.load %arg3[%c0_3, %c0_4] : memref<1x128xf32, #tpu.memory_space<vmem>>, vector<1x128xf32>
    %3 = vector.extract_strided_slice %0 {offsets = [0, 0], sizes = [16, 1], strides = [1, 1]} : vector<16x4xf32> to vector<16x1xf32>
    %4 = vector.extract_strided_slice %1 {offsets = [0, 0], sizes = [1, 128], strides = [1, 1]} : vector<4x128xf32> to vector<1x128xf32>
    %5 = vector.broadcast %3 : vector<16x1xf32> to vector<16x128xf32>
    %6 = vector.broadcast %4 : vector<1x128xf32> to vector<16x128xf32>
    %7 = arith.mulf %5, %6 : vector<16x128xf32>
    %8 = vector.broadcast %2 : vector<1x128xf32> to vector<16x128xf32>
    %9 = arith.addf %8, %7 : vector<16x128xf32>
    %10 = vector.extract_strided_slice %0 {offsets = [0, 1], sizes = [16, 1], strides = [1, 1]} : vector<16x4xf32> to vector<16x1xf32>
    %11 = vector.extract_strided_slice %1 {offsets = [1, 0], sizes = [1, 128], strides = [1, 1]} : vector<4x128xf32> to vector<1x128xf32>
    %12 = vector.broadcast %10 : vector<16x1xf32> to vector<16x128xf32>
    %13 = vector.broadcast %11 : vector<1x128xf32> to vector<16x128xf32>
    %14 = arith.mulf %12, %13 : vector<16x128xf32>
    %15 = arith.addf %9, %14 : vector<16x128xf32>
    %16 = vector.extract_strided_slice %0 {offsets = [0, 2], sizes = [16, 1], strides = [1, 1]} : vector<16x4xf32> to vector<16x1xf32>
    %17 = vector.extract_strided_slice %1 {offsets = [2, 0], sizes = [1, 128], strides = [1, 1]} : vector<4x128xf32> to vector<1x128xf32>
    %18 = vector.broadcast %16 : vector<16x1xf32> to vector<16x128xf32>
    %19 = vector.broadcast %17 : vector<1x128xf32> to vector<16x128xf32>
    %20 = arith.mulf %18, %19 : vector<16x128xf32>
    %21 = arith.addf %15, %20 : vector<16x128xf32>
    %22 = vector.extract_strided_slice %0 {offsets = [0, 3], sizes = [16, 1], strides = [1, 1]} : vector<16x4xf32> to vector<16x1xf32>
    %23 = vector.extract_strided_slice %1 {offsets = [3, 0], sizes = [1, 128], strides = [1, 1]} : vector<4x128xf32> to vector<1x128xf32>
    %24 = vector.broadcast %22 : vector<16x1xf32> to vector<16x128xf32>
    %25 = vector.broadcast %23 : vector<1x128xf32> to vector<16x128xf32>
    %26 = arith.mulf %24, %25 : vector<16x128xf32>
    %27 = arith.addf %21, %26 : vector<16x128xf32>
    %cst = arith.constant 0.000000e+00 : f32
    %28 = vector.broadcast %cst : f32 to vector<16x128xf32>
    %29 = arith.maximumf %27, %28 : vector<16x128xf32>
    %30 = arith.truncf %29 : vector<16x128xf32> to vector<16x128xbf16>
    %c0_5 = arith.constant 0 : index
    %c0_6 = arith.constant 0 : index
    %31 = vector.load %arg4[%c0_5, %c0_6] : memref<128x128xbf16, #tpu.memory_space<vmem>>, vector<128x128xbf16>
    %cst_7 = arith.constant dense<0.000000e+00> : vector<16x128xf32>
    %32 = tpu.matmul %30, %31, %cst_7 {dimension_numbers = #tpu.dot_dimension_numbers<[1], [0], [0], [1], [0, 0, 1, 1], [], []>} : vector<16x128xbf16>, vector<128x128xbf16>, vector<16x128xf32> -> vector<16x128xf32>
    %c0_8 = arith.constant 0 : index
    %c0_9 = arith.constant 0 : index
    %33 = vector.load %arg5[%c0_8, %c0_9] : memref<1x128xf32, #tpu.memory_space<vmem>>, vector<1x128xf32>
    %34 = vector.broadcast %33 : vector<1x128xf32> to vector<16x128xf32>
    %35 = arith.addf %32, %34 : vector<16x128xf32>
    %c0_10 = arith.constant 0 : index
    %c0_11 = arith.constant 0 : index
    %36 = vector.load %arg6[%c0_10, %c0_11] : memref<16x128xf32, #tpu.memory_space<vmem>>, vector<16x128xf32>
    tpu.vector_store %arg6[%c0_10, %c0_11], %35 {strides = array<i32>} : memref<16x128xf32, #tpu.memory_space<vmem>>, vector<16x128xf32>,
    return
  }
  func.func @transform_0(%arg0: i32) -> (i32, i32) {
    %c0_i32 = arith.constant 0 : i32
    %c0_i32_0 = arith.constant 0 : i32
    return %arg0, %c0_i32 : i32, i32
  }
  func.func @transform_1(%arg0: i32) -> (i32, i32) {
    %c0_i32 = arith.constant 0 : i32
    %c0_i32_0 = arith.constant 0 : i32
    %c0_i32_1 = arith.constant 0 : i32
    return %c0_i32, %c0_i32_0 : i32, i32
  }
  func.func @transform_2(%arg0: i32) -> (i32, i32) {
    %c0_i32 = arith.constant 0 : i32
    %c0_i32_0 = arith.constant 0 : i32
    %c0_i32_1 = arith.constant 0 : i32
    return %c0_i32, %c0_i32_0 : i32, i32
  }
  func.func @transform_3(%arg0: i32) -> (i32, i32) {
    %c0_i32 = arith.constant 0 : i32
    %c0_i32_0 = arith.constant 0 : i32
    %c0_i32_1 = arith.constant 0 : i32
    return %c0_i32, %c0_i32_0 : i32, i32
  }
  func.func @transform_4(%arg0: i32) -> (i32, i32) {
    %c0_i32 = arith.constant 0 : i32
    %c0_i32_0 = arith.constant 0 : i32
    %c0_i32_1 = arith.constant 0 : i32
    return %c0_i32, %c0_i32_0 : i32, i32
  }
  func.func @transform_5(%arg0: i32) -> (i32, i32) {
    %c0_i32 = arith.constant 0 : i32
    %c0_i32_0 = arith.constant 0 : i32
    return %arg0, %c0_i32 : i32, i32
  }
}

</mosaic_0001>

<llo_original>
// kernel: pointcloud_mlp.1
$region0: #{pointcloud_mlp.1}
  #allocation0 [shape = 'u32[]', space=smem, size = 0x4, offset = 0x4, fixed_abs, tag = 'smem constant byte address 0x4 - core index']
  #allocation1 [shape = 'u32[144,128]{1,0:T(1,128)}', space=vmem, size = 0x12000, scoped, tag = 'internal scratch']
  %s0 = inlined_call_operand.vmem [shape: f32[16,4], index: 0, kind: input, shape index: {}]
  %s1 = inlined_call_operand.vmem [shape: f32[4,128], index: 1, kind: input, shape index: {}]
  %s2 = inlined_call_operand.vmem [shape: f32[1,128], index: 2, kind: input, shape index: {}]
  %s3 = inlined_call_operand.hbm [shape: bf16[128,128], index: 3, kind: input, shape index: {}]
  %s4 = inlined_call_operand.vmem [shape: f32[1,128], index: 4, kind: input, shape index: {}]
  %s5 = inlined_call_operand.hbm [shape: f32[16,128], index: 5, kind: output, shape index: {}]
  %s6 = sld [smem:[#allocation0]]
  $region34: #{pointcloud_mlp.1} parent=0
    _
  %s8 = ssub.s32 1, %s6
  %s9 = scalar_select 0, %s8, %s6
  $region1: #{pointcloud_mlp.1} parent=0
    #allocation2 [shape = 'u8[32768]{0}', space=vmem, size = 0x8000, scoped, tag = 'input window, operand 3, single buffered']
    #allocation3 [shape = 's32[1]{0}', space=sflag, size = 0x4, scoped, tag = 'scoped memory for pointcloud_mlp.1']
    #allocation4 [shape = 's32[1]{0}', space=sflag, size = 0x4, scoped, tag = 'scoped memory for pointcloud_mlp.1']
    #allocation5 [shape = 'u8[8192]{0}', space=vmem, size = 0x2000, scoped, tag = 'output window, operand 0, single buffered']
    %10 = vsyncpa [#allocation3], 0
    %11 = vsyncpa [#allocation4], 0
    // Predicated region
    $region2: #{pointcloud_mlp.1} parent=1 // pred_check
      _
    $region3: #{pointcloud_mlp.1} parent=1 // pred_check_branch
      %13 = sbr.rel (0) target = $region5
    $region4: #{pointcloud_mlp.1} parent=1 // pred_region
      _
    $region5: #{pointcloud_mlp.1} parent=1 // pred_fallthru
      _
    // Predicated region
    $region6: #{pointcloud_mlp.1} parent=1 // pred_check
      _
    $region7: #{pointcloud_mlp.1} parent=1 // pred_check_branch
      %15 = sbr.rel (0) target = $region9
    $region8: #{pointcloud_mlp.1} parent=1 // pred_region
      _
    $region9: #{pointcloud_mlp.1} parent=1 // pred_fallthru
      _
    // Predicated region
    $region10: #{pointcloud_mlp.1} parent=1 // pred_check
      _
    $region11: #{pointcloud_mlp.1} parent=1 // pred_check_branch
      %17 = sbr.rel (0) target = $region13
    $region12: #{pointcloud_mlp.1} parent=1 // pred_region
      _
    $region13: #{pointcloud_mlp.1} parent=1 // pred_fallthru
      _
    // Predicated region
    $region14: #{pointcloud_mlp.1} parent=1 // pred_check
      _
    $region15: #{pointcloud_mlp.1} parent=1 // pred_check_branch
      %19 = sbr.rel (0) target = $region17
    $region16: #{pointcloud_mlp.1} parent=1 // pred_region
      %s21 = ssub.s32 1024, 1024
      %22 = vsyncadd [#allocation3], %s21
      %s23 = sshll.u32 [#allocation2], 4
      %s24 = int_to_ptr.vmem [resolvable:$true] %s23
      %29 = dma.hbm_to_vmem [thread:$0]  %s3, 1024, %s24, [#allocation3], 64, 64, 4
    $region17: #{pointcloud_mlp.1} parent=1 // pred_fallthru
      _
    // Predicated region
    $region18: #{pointcloud_mlp.1} parent=1 // pred_check
      _
    $region19: #{pointcloud_mlp.1} parent=1 // pred_check_branch
      %31 = sbr.rel (0) target = $region21
    $region20: #{pointcloud_mlp.1} parent=1 // pred_region
      _
    $region21: #{pointcloud_mlp.1} parent=1 // pred_fallthru
      _
    // Predicated region
    $region22: #{pointcloud_mlp.1} parent=1 // pred_check
      _
    $region23: #{pointcloud_mlp.1} parent=1 // pred_check_branch
      %33 = sbr.rel (0) target = $region25
    $region24: #{pointcloud_mlp.1} parent=1 // pred_region
      %34 = dma.done [#allocation3], 1024
    $region25: #{pointcloud_mlp.1} parent=1 // pred_fallthru
      _
    %v36 = vld [vmem:[%s0] sm:$0xff]
    %v37 = vld [vmem:[%s0 + $0x8] sm:$0xff]
    %v38 = vld [vmem:[%s1] sm:$0xf]
    %v39 = vld [vmem:[%s2] sm:$0x1]
    %41 = vset.pattern.permute.xlu0 0
    %42 = vperm.xlu0 %41, %v36
    %v43 = vpop.permute.xlu0 %42
    %46 = vset.pattern.permute.xlu0 0
    %47 = vperm.xlu0 %46, %v37
    %v48 = vpop.permute.xlu0 %47
    %v50 = vlaneseq
    %v51 = vshrl.u32 %v50, 7
    %v52 = vsub.s32 0, %v51
    %v53 = vrot.slane %v38, %v52
    %v54 = vmul.f32 %v43, %v53
    %v55 = vmul.f32 %v48, %v53
    %v57 = vlaneseq
    %v58 = vshrl.u32 %v57, 7
    %v59 = vsub.s32 0, %v58
    %v60 = vrot.slane %v39, %v59
    %v62 = vadd.f32 %v60, %v54
    %v63 = vadd.f32 %v60, %v55
    %64 = vset.pattern.permute.xlu0 1
    %65 = vperm.xlu0 %64, %v36
    %v66 = vpop.permute.xlu0 %65
    %68 = vset.pattern.permute.xlu0 1
    %69 = vperm.xlu0 %68, %v37
    %v70 = vpop.permute.xlu0 %69
    %v72 = vlaneseq
    %v73 = vshrl.u32 %v72, 7
    %v74 = vsub.s32 1, %v73
    %v75 = vrot.slane %v38, %v74
    %v76 = vmul.f32 %v66, %v75
    %v77 = vmul.f32 %v70, %v75
    %v78 = vadd.f32 %v62, %v76
    %v79 = vadd.f32 %v63, %v77
    %80 = vset.pattern.permute.xlu0 2
    %81 = vperm.xlu0 %80, %v36
    %v82 = vpop.permute.xlu0 %81
    %84 = vset.pattern.permute.xlu0 2
    %85 = vperm.xlu0 %84, %v37
    %v86 = vpop.permute.xlu0 %85
    %v88 = vlaneseq
    %v89 = vshrl.u32 %v88, 7
    %v90 = vsub.s32 2, %v89
    %v91 = vrot.slane %v38, %v90
    %v92 = vmul.f32 %v82, %v91
    %v93 = vmul.f32 %v86, %v91
    %v94 = vadd.f32 %v78, %v92
    %v95 = vadd.f32 %v79, %v93
    %96 = vset.pattern.permute.xlu0 3
    %97 = vperm.xlu0 %96, %v36
    %v98 = vpop.permute.xlu0 %97
    %100 = vset.pattern.permute.xlu0 3
    %101 = vperm.xlu0 %100, %v37
    %v102 = vpop.permute.xlu0 %101
    %v104 = vlaneseq
    %v105 = vshrl.u32 %v104, 7
    %v106 = vsub.s32 3, %v105
    %v107 = vrot.slane %v38, %v106
    %v108 = vmul.f32 %v98, %v107
    %v109 = vmul.f32 %v102, %v107
    %v110 = vadd.f32 %v94, %v108
    %v111 = vadd.f32 %v95, %v109
    %v112 = vmax.f32 %v110, 0.0
    %v113 = vmax.f32 %v111, 0.0
    %v114 = vpack.c.bf16 %v113, %v112
    %v115 = vld [vmem:[#allocation2] sm:$0xf]
    %v116 = vld [vmem:[#allocation2 + $0x4] sm:$0xf]
    %v117 = vld [vmem:[#allocation2 + $0x8] sm:$0xf]
    %v118 = vld [vmem:[#allocation2 + $0xc] sm:$0xf]
    %v119 = vld [vmem:[#allocation2 + $0x10] sm:$0xf]
    %v120 = vld [vmem:[#allocation2 + $0x14] sm:$0xf]
    %v121 = vld [vmem:[#allocation2 + $0x18] sm:$0xf]
    %v122 = vld [vmem:[#allocation2 + $0x1c] sm:$0xf]
    %v123 = vld [vmem:[#allocation2 + $0x20] sm:$0xf]
    %v124 = vld [vmem:[#allocation2 + $0x24] sm:$0xf]
    %v125 = vld [vmem:[#allocation2 + $0x28] sm:$0xf]
    %v126 = vld [vmem:[#allocation2 + $0x2c] sm:$0xf]
    %v127 = vld [vmem:[#allocation2 + $0x30] sm:$0xf]
    %v128 = vld [vmem:[#allocation2 + $0x34] sm:$0xf]
    %v129 = vld [vmem:[#allocation2 + $0x38] sm:$0xf]
    %v130 = vld [vmem:[#allocation2 + $0x3c] sm:$0xf]
    %v131 = vld [vmem:[%s4] sm:$0x1]
    %v133 = vlaneseq
    %v134 = vshrl.u32 %v133, 7
    %v135 = vsub.s32 0, %v134
    %v136 = vrot.slane %v131, %v135
    %v154 = vunpack.c.l.b16 %v115
    %v155 = vunpack.c.l.b16 %v116
    %v156 = vunpack.c.l.b16 %v117
    %v157 = vunpack.c.l.b16 %v118
    %v158 = vunpack.c.l.b16 %v119
    %v159 = vunpack.c.l.b16 %v120
    %v160 = vunpack.c.l.b16 %v121
    %v161 = vunpack.c.l.b16 %v122
    %v162 = vunpack.c.l.b16 %v123
    %v163 = vunpack.c.l.b16 %v124
    %v164 = vunpack.c.l.b16 %v125
    %v165 = vunpack.c.l.b16 %v126
    %v166 = vunpack.c.l.b16 %v127
    %v167 = vunpack.c.l.b16 %v128
    %v168 = vunpack.c.l.b16 %v129
    %v169 = vunpack.c.l.b16 %v130
    %v170 = vpack.c.b16 %v155, %v154
    %v171 = vpack.c.b16 %v157, %v156
    %v172 = vpack.c.b16 %v159, %v158
    %v173 = vpack.c.b16 %v161, %v160
    %v174 = vpack.c.b16 %v163, %v162
    %v175 = vpack.c.b16 %v165, %v164
    %v176 = vpack.c.b16 %v167, %v166
    %v177 = vpack.c.b16 %v169, %v168
    %186 = vmatprep.subr.bf16.mxu0 0
    %187 = vmatpush1.bf16.msra.mxu0 %v177
    %188 = vmatprep.subr.bf16.mxu0 0
    %189 = vmatpush1.bf16.msra.mxu0 %v176
    %190 = vmatprep.subr.bf16.mxu0 0
    %191 = vmatpush1.bf16.msra.mxu0 %v175
    %192 = vmatprep.subr.bf16.mxu0 0
    %193 = vmatpush1.bf16.msra.mxu0 %v174
    %194 = vmatprep.subr.bf16.mxu0 0
    %195 = vmatpush1.bf16.msra.mxu0 %v173
    %196 = vmatprep.subr.bf16.mxu0 0
    %197 = vmatpush1.bf16.msra.mxu0 %v172
    %198 = vmatprep.subr.bf16.mxu0 0
    %199 = vmatpush1.bf16.msra.mxu0 %v171
    %200 = vmatprep.subr.bf16.mxu0 0
    %201 = vmatpush1.bf16.msra.mxu0 %v170
    %202 = vmatprep.subr.bf16.mxu0 0
    %203 = vmatpush2.bf16.msra.mxu0 0
    %204 = vmatprep.subr.bf16.mxu0 0
    %205 = vmatpush2.bf16.msra.mxu0 0
    %206 = vmatprep.subr.bf16.mxu0 0
    %207 = vmatpush2.bf16.msra.mxu0 0
    %208 = vmatprep.subr.bf16.mxu0 0
    %209 = vmatpush2.bf16.msra.mxu0 0
    %210 = vmatprep.subr.bf16.mxu0 0
    %211 = vmatpush2.bf16.msra.mxu0 0
    %212 = vmatprep.subr.bf16.mxu0 0
    %213 = vmatpush2.bf16.msra.mxu0 0
    %214 = vmatprep.subr.bf16.mxu0 0
    %215 = vmatpush2.bf16.msra.mxu0 0
    %216 = vmatprep.subr.bf16.mxu0 0
    %217 = vmatpush2.bf16.msra.mxu0 0
    %218 = vmatprep.mubr.bf16.mxu0 0
    %219 = vmatmul.mubr.bf16.gmra.mxu0 %v114
    %v220 = vpop.f32.mrf.mxu0
    %v221 = vadd.f32 %v136, %v220
    %v222 = vpop.f32.mrf.mxu0
    %v223 = vpop.f32.mrf.mxu0
    %v224 = vadd.f32 %v136, %v223
    %v225 = vpop.f32.mrf.mxu0
    %226 = vdwg.mxu0
    %227 = vst [vmem:[#allocation5] sm:$0xff] %v221
    %228 = vst [vmem:[#allocation5 + $0x8] sm:$0xff] %v224
    // Predicated region
    $region26: #{pointcloud_mlp.1} parent=1 // pred_check
      _
    $region27: #{pointcloud_mlp.1} parent=1 // pred_check_branch
      %230 = sbr.rel (0) target = $region29
    $region28: #{pointcloud_mlp.1} parent=1 // pred_region
      %s232 = ssub.s32 256, 256
      %233 = vsyncadd [#allocation4], %s232
      %s234 = sshll.u32 [#allocation5], 4
      %s235 = int_to_ptr.vmem [resolvable:$true] %s234
      %240 = dma.vmem_to_hbm [thread:$0]  %s235, 256, %s5, [#allocation4], 128, 128, 8
    $region29: #{pointcloud_mlp.1} parent=1 // pred_fallthru
      _
    // Predicated region
    $region30: #{pointcloud_mlp.1} parent=1 // pred_check
      _
    $region31: #{pointcloud_mlp.1} parent=1 // pred_check_branch
      %242 = sbr.rel (0) target = $region33
    $region32: #{pointcloud_mlp.1} parent=1 // pred_region
      %243 = dma.done [#allocation4], 256
    $region33: #{pointcloud_mlp.1} parent=1 // pred_fallthru
      _
    %244 = vsyncpa [#allocation3], 1
    %245 = vsyncpa [#allocation4], 1

</llo_original>
